<compile_context>
chip_gen: v5e
topology: v5e:2x2
jax: 0.10.0
libtpu: 0.0.40
codegen_flags: <defaults>
</compile_context>

<pallas_src>
import functools

import jax
import jax.numpy as jnp
from jax.experimental import pallas as pl
from jax.experimental.pallas import tpu as pltpu

MIB = 1024 * 1024


def _round_up(x, m):
    return ((x + m - 1) // m) * m


def _pad2d(a, rows, cols):
    pr, pc = rows - a.shape[0], cols - a.shape[1]
    if pr == 0 and pc == 0:
        return a
    return jnp.pad(a, ((0, pr), (0, pc)))


def _tpu_vmem_bytes():
    """Physical per-core VMEM; conservative fallback if the query is unavailable."""
    try:
        return int(pltpu.get_tpu_info().vmem_capacity_bytes)
    except Exception:  # query unsupported -> assume v7x's 64 MiB per TC
        return 64 * MIB


def _working_set_bytes(tm, th, c_pad, out_bytes, use_acc):
    """Double-buffered VMEM working set + kernel-internal temporaries."""
    x_b = 2 * tm * c_pad * 2              # bf16 x block, double-buffered
    w1_b = 2 * c_pad * th * 2             # bf16 W1 chunk
    w2_b = 2 * th * c_pad * 2             # bf16 W2 chunk
    o_b = 2 * tm * c_pad * out_bytes      # output block
    acc_b = tm * c_pad * 4 if use_acc else 0
    h_b = tm * th * (4 + 2)               # f32 intermediate h + its bf16 MXU copy
    bias_b = 2 * 8 * th * 4 + 2 * 8 * c_pad * 4  # (1, .) blocks pad to 8 sublanes
    return x_b + w1_b + w2_b + o_b + acc_b + h_b + bias_b


# ---------------------------------------------------------------------------
# Kernels
# ---------------------------------------------------------------------------
def _ffn_kernel_acc(x_ref, w1_ref, b1_ref, w2_ref, b2_ref, o_ref, acc_ref):
    """bf16 (or other non-f32) output: f32 VMEM scratch accumulator."""
    j = pl.program_id(1)

    @pl.when(j == 0)
    def _():
        acc_ref[...] = jnp.zeros_like(acc_ref)

    # h = relu(x @ W1[:, chunk] + b1[chunk]), f32 accumulation on the MXU.
    h = jnp.dot(x_ref[...], w1_ref[...], preferred_element_type=jnp.float32)
    h = jnp.maximum(h + b1_ref[...], 0.0)

    # This hidden chunk's contribution to the output.
    acc_ref[...] += jnp.dot(h.astype(w2_ref.dtype), w2_ref[...],
                            preferred_element_type=jnp.float32)

    @pl.when(j == pl.num_programs(1) - 1)
    def _():
        o_ref[...] = (acc_ref[...] + b2_ref[...]).astype(o_ref.dtype)


def _ffn_kernel_inplace(x_ref, w1_ref, b1_ref, w2_ref, b2_ref, o_ref):
    """f32 output: accumulate directly into the VMEM-resident output block."""
    j = pl.program_id(1)

    @pl.when(j == 0)
    def _():
        o_ref[...] = jnp.zeros_like(o_ref)

    h = jnp.dot(x_ref[...], w1_ref[...], preferred_element_type=jnp.float32)
    h = jnp.maximum(h + b1_ref[...], 0.0)
    o_ref[...] += jnp.dot(h.astype(w2_ref.dtype), w2_ref[...],
                          preferred_element_type=jnp.float32)

    @pl.when(j == pl.num_programs(1) - 1)
    def _():
        o_ref[...] += b2_ref[...]


# ---------------------------------------------------------------------------
# Wrappers
# ---------------------------------------------------------------------------
def prepare_ffn_params(w1, b1, w2, b2, *, compute_dtype=jnp.bfloat16, th=None):
    """Pad + cast the weights ONCE (hoisted out of the per-call path).

    Weights are (in_features, out_features) = W_torch.T, so
    y = relu(x @ W1 + b1) @ W2 + b2 matches PyTorch nn.Linear semantics.
    """
    C, H = w1.shape
    vmem = _tpu_vmem_bytes()
    if th is None:
        # Fatter reduction steps on the big-VMEM chips (v5e/v6e); multiples of
        # 256 keep the 2x256^2 MXUs (v6e/v7x) full.
        th = 1024 if vmem >= 100 * MIB else 512
    th = min(th, _round_up(H, 128))
    c_pad = _round_up(C, 128)
    h_pad = _round_up(H, th)
    params = dict(
        w1=_pad2d(jnp.asarray(w1, compute_dtype), c_pad, h_pad),
        b1=_pad2d(jnp.asarray(b1, jnp.float32).reshape(1, -1), 1, h_pad),
        w2=_pad2d(jnp.asarray(w2, compute_dtype), h_pad, c_pad),
        b2=_pad2d(jnp.asarray(b2, jnp.float32).reshape(1, -1), 1, c_pad),
    )
    meta = dict(C=C, H=H, th=th, c_pad=c_pad, h_pad=h_pad, vmem=vmem)
    return params, meta


@functools.partial(
    jax.jit,
    static_argnames=("tm", "th", "out_dtype", "vmem_limit", "use_acc"))
def _ffn_pallas(x, w1p, b1p, w2p, b2p, *, tm, th, out_dtype, vmem_limit, use_acc):
    B, T, C = x.shape
    M = B * T
    c_pad, h_pad = w1p.shape
    compute_dtype = w1p.dtype
    out_bytes = jnp.dtype(out_dtype).itemsize

    m_pad = _round_up(max(M, tm), tm)
    x2d = _pad2d(x.reshape(M, C).astype(compute_dtype), m_pad, c_pad)

    grid = (m_pad // tm, h_pad // th)
    grid0 = grid[0]

    cost = pl.CostEstimate(
        flops=4 * m_pad * c_pad * h_pad,          # two matmuls, 2 flops per MAC
        transcendentals=0,
        bytes_accessed=(
            x2d.size * 2                                     # x read once
            + grid0 * (w1p.size + w2p.size) * 2              # weights re-streamed per M tile
            + grid0 * (b1p.size + b2p.size) * 4
            + m_pad * c_pad * out_bytes),                    # output writeback
    )

    in_specs = [
        pl.BlockSpec((tm, c_pad), lambda i, j: (i, 0)),      # x rows
        pl.BlockSpec((c_pad, th), lambda i, j: (0, j)),      # W1 hidden chunk
        pl.BlockSpec((1, th), lambda i, j: (0, j)),          # b1 chunk
        pl.BlockSpec((th, c_pad), lambda i, j: (j, 0)),      # W2 hidden chunk
        pl.BlockSpec((1, c_pad), lambda i, j: (0, 0)),       # b2
    ]
    out_spec = pl.BlockSpec((tm, c_pad), lambda i, j: (i, 0))

    kernel = _ffn_kernel_acc if use_acc else _ffn_kernel_inplace
    scratch = [pltpu.VMEM((tm, c_pad), jnp.float32)] if use_acc else []

    out2d = pl.pallas_call(
        kernel,
        out_shape=jax.ShapeDtypeStruct((m_pad, c_pad), out_dtype),
        grid_spec=pltpu.PrefetchScalarGridSpec(
            num_scalar_prefetch=0,
            grid=grid,
            in_specs=in_specs,
            out_specs=out_spec,
            scratch_shapes=scratch),
        compiler_params=pltpu.CompilerParams(
            # M axis parallel (megacore / v7x dual-TC sharding); hidden
            # reduction axis last + arbitrary for the resident accumulator.
            dimension_semantics=("parallel", "arbitrary"),
            vmem_limit_bytes=vmem_limit),
        cost_estimate=cost,
    )(x2d, w1p, b1p, w2p, b2p)

    return out2d[:M, :C].reshape(B, T, C)


def feed_forward(x, params, meta, *, out_dtype=jnp.bfloat16, tm=None):
    """FeedForward forward pass (Dropout = identity, inference mode).

    out_dtype defaults to bf16 (halves output writeback + VMEM); with
    out_dtype=jnp.float32 the kernel accumulates directly into the output.
    """
    B, T, C = x.shape
    M = B * T
    th, c_pad, vmem = meta["th"], meta["c_pad"], meta["vmem"]
    out_dtype = jnp.dtype(out_dtype)
    out_bytes = out_dtype.itemsize
    use_acc = out_dtype != jnp.dtype(jnp.float32)

    # --- generation-aware VMEM budget & row-tile selection -----------------
    vmem_limit = min(int(vmem * 0.75), 96 * MIB)   # ~96 MiB v5e/v6e, ~48 MiB v7x
    budget = vmem_limit - 4 * MIB                  # headroom for Mosaic internals

    if tm is None:
        # Weights are re-streamed once per M tile -> arithmetic intensity
        # ~ tm/2 FLOP/byte; need tm >~ 1280 (v6e) / 640 (v7x) / 480 (v5e)
        # to be MXU-bound rather than weight-streaming-bound.
        tm = 1536 if vmem >= 100 * MIB else 640

    m_unit = _round_up(M, 8)
    tm_eff = min(tm, m_unit)
    if m_unit >= 16:
        # At least 2 row tiles so the "parallel" M axis feeds both TCs.
        tm_eff = min(tm_eff, _round_up((m_unit + 1) // 2, 8))
    # Shrink tm until the double-buffered working set (incl. the f32 h
    # intermediate and its bf16 copy) fits the budget.
    while (tm_eff > 8
           and _working_set_bytes(tm_eff, th, c_pad, out_bytes, use_acc) > budget):
        tm_eff = max(8, _round_up(tm_eff // 2, 8))

    return _ffn_pallas(x, params["w1"], params["b1"], params["w2"], params["b2"],
                       tm=tm_eff, th=th, out_dtype=out_dtype,
                       vmem_limit=vmem_limit, use_acc=bool(use_acc))


if __name__ == "__main__":
    # Small shapes consistent with the module: batch=2, seq=8, n_embd=32.
    B, T, C = 2, 8, 32
    H = 4 * C
    key = jax.random.PRNGKey(0)
    kx, k1, kb1, k2, kb2 = jax.random.split(key, 5)

    x = jax.random.normal(kx, (B, T, C), dtype=jnp.float32)
    w1 = jax.random.normal(k1, (C, H), dtype=jnp.float32) * 0.02
    b1 = jax.random.normal(kb1, (1, H), dtype=jnp.float32) * 0.02
    w2 = jax.random.normal(k2, (H, C), dtype=jnp.float32) * 0.02
    b2 = jax.random.normal(kb2, (1, C), dtype=jnp.float32) * 0.02

    params, meta = prepare_ffn_params(w1, b1, w2, b2)  # hoisted pad/cast (once)

    ref = jnp.maximum(x @ w1 + b1[0], 0.0) @ w2 + b2[0]

    # Default path: bf16 output, f32 VMEM scratch accumulator.
    out_bf16 = jax.block_until_ready(feed_forward(x, params, meta))
    assert out_bf16.shape == (B, T, C) and out_bf16.dtype == jnp.bfloat16
    assert jnp.allclose(out_bf16.astype(jnp.float32), ref, atol=2e-2, rtol=5e-2), \
        "bf16-output mismatch vs reference"

    # f32-output path: accumulates directly into the resident output block.
    out_f32 = jax.block_until_ready(feed_forward(x, params, meta, out_dtype=jnp.float32))
    assert out_f32.shape == (B, T, C) and out_f32.dtype == jnp.float32
    assert jnp.allclose(out_f32, ref, atol=1e-2, rtol=5e-2), \
        "f32-output mismatch vs reference"

    print("KERNEL_OK")
</pallas_src>

<mosaic_0001>
module attributes {stable_mosaic.version = 11 : i64} {
  func.func @_ffn_kernel_acc(%arg0: i32, %arg1: i32, %arg2: memref<8x128xbf16, #tpu.memory_space<vmem>>, %arg3: memref<128x128xbf16, #tpu.memory_space<vmem>>, %arg4: memref<1x128xf32, #tpu.memory_space<vmem>>, %arg5: memref<128x128xbf16, #tpu.memory_space<vmem>>, %arg6: memref<1x128xf32, #tpu.memory_space<vmem>>, %arg7: memref<8x128xbf16, #tpu.memory_space<vmem>>, %arg8: memref<8x128xf32, #tpu.memory_space<vmem>>) attributes {dimension_semantics = [#tpu.dimension_semantics<parallel>, #tpu.dimension_semantics<arbitrary>], iteration_bounds = array<i64: 2, 1>, scalar_prefetch = 0 : i64, scratch_operands = 1 : i64, tpu.core_type = #tpu.core_type<tc>, window_params = [{transform_indices = @transform_0, window_bounds = array<i64: 8, 128>}, {transform_indices = @transform_1, window_bounds = array<i64: 128, 128>}, {transform_indices = @transform_2, window_bounds = array<i64: 1, 128>}, {transform_indices = @transform_3, window_bounds = array<i64: 128, 128>}, {pipeline_mode = #tpu.pipeline_mode<synchronous>, transform_indices = @transform_4, window_bounds = array<i64: 1, 128>}, {transform_indices = @transform_5, window_bounds = array<i64: 8, 128>}]} {
    %c0_i32 = arith.constant 0 : i32
    %0 = arith.cmpi eq, %arg1, %c0_i32 : i32
    %1 = arith.extui %0 : i1 to i32
    %c0_i32_0 = arith.constant 0 : i32
    %2 = arith.cmpi ne, %1, %c0_i32_0 : i32
    scf.if %2 {
      %cst_16 = arith.constant 0.000000e+00 : f32
      %20 = vector.broadcast %cst_16 : f32 to vector<8x128xf32>
      %c0_17 = arith.constant 0 : index
      %c0_18 = arith.constant 0 : index
      %21 = vector.load %arg8[%c0_17, %c0_18] : memref<8x128xf32, #tpu.memory_space<vmem>>, vector<8x128xf32>
      tpu.vector_store %arg8[%c0_17, %c0_18], %20 {strides = array<i32>} : memref<8x128xf32, #tpu.memory_space<vmem>>, vector<8x128xf32>,
    } else {
    }
    %c0 = arith.constant 0 : index
    %c0_1 = arith.constant 0 : index
    %3 = vector.load %arg2[%c0, %c0_1] : memref<8x128xbf16, #tpu.memory_space<vmem>>, vector<8x128xbf16>
    %c0_2 = arith.constant 0 : index
    %c0_3 = arith.constant 0 : index
    %4 = vector.load %arg3[%c0_2, %c0_3] : memref<128x128xbf16, #tpu.memory_space<vmem>>, vector<128x128xbf16>
    %cst = arith.constant dense<0.000000e+00> : vector<8x128xf32>
    %5 = tpu.matmul %3, %4, %cst {dimension_numbers = #tpu.dot_dimension_numbers<[1], [0], [0], [1], [0, 0, 1, 1], [], []>} : vector<8x128xbf16>, vector<128x128xbf16>, vector<8x128xf32> -> vector<8x128xf32>
    %c0_4 = arith.constant 0 : index
    %c0_5 = arith.constant 0 : index
    %6 = vector.load %arg4[%c0_4, %c0_5] : memref<1x128xf32, #tpu.memory_space<vmem>>, vector<1x128xf32>
    %7 = vector.broadcast %6 : vector<1x128xf32> to vector<8x128xf32>
    %8 = arith.addf %5, %7 : vector<8x128xf32>
    %cst_6 = arith.constant 0.000000e+00 : f32
    %9 = vector.broadcast %cst_6 : f32 to vector<8x128xf32>
    %10 = arith.maximumf %8, %9 : vector<8x128xf32>
    %c0_7 = arith.constant 0 : index
    %c0_8 = arith.constant 0 : index
    %11 = vector.load %arg8[%c0_7, %c0_8] : memref<8x128xf32, #tpu.memory_space<vmem>>, vector<8x128xf32>
    %12 = arith.truncf %10 : vector<8x128xf32> to vector<8x128xbf16>
    %c0_9 = arith.constant 0 : index
    %c0_10 = arith.constant 0 : index
    %13 = vector.load %arg5[%c0_9, %c0_10] : memref<128x128xbf16, #tpu.memory_space<vmem>>, vector<128x128xbf16>
    %cst_11 = arith.constant dense<0.000000e+00> : vector<8x128xf32>
    %14 = tpu.matmul %12, %13, %cst_11 {dimension_numbers = #tpu.dot_dimension_numbers<[1], [0], [0], [1], [0, 0, 1, 1], [], []>} : vector<8x128xbf16>, vector<128x128xbf16>, vector<8x128xf32> -> vector<8x128xf32>
    %15 = arith.addf %11, %14 : vector<8x128xf32>
    %c0_12 = arith.constant 0 : index
    %c0_13 = arith.constant 0 : index
    %16 = vector.load %arg8[%c0_12, %c0_13] : memref<8x128xf32, #tpu.memory_space<vmem>>, vector<8x128xf32>
    tpu.vector_store %arg8[%c0_12, %c0_13], %15 {strides = array<i32>} : memref<8x128xf32, #tpu.memory_space<vmem>>, vector<8x128xf32>,
    %c0_i32_14 = arith.constant 0 : i32
    %17 = arith.cmpi eq, %arg1, %c0_i32_14 : i32
    %18 = arith.extui %17 : i1 to i32
    %c0_i32_15 = arith.constant 0 : i32
    %19 = arith.cmpi ne, %18, %c0_i32_15 : i32
    scf.if %19 {
      %c0_16 = arith.constant 0 : index
      %c0_17 = arith.constant 0 : index
      %20 = vector.load %arg8[%c0_16, %c0_17] : memref<8x128xf32, #tpu.memory_space<vmem>>, vector<8x128xf32>
      %c0_18 = arith.constant 0 : index
      %c0_19 = arith.constant 0 : index
      %21 = vector.load %arg6[%c0_18, %c0_19] : memref<1x128xf32, #tpu.memory_space<vmem>>, vector<1x128xf32>
      %22 = vector.broadcast %21 : vector<1x128xf32> to vector<8x128xf32>
      %23 = arith.addf %20, %22 : vector<8x128xf32>
      %24 = arith.truncf %23 : vector<8x128xf32> to vector<8x128xbf16>
      %c0_20 = arith.constant 0 : index
      %c0_21 = arith.constant 0 : index
      %25 = vector.load %arg7[%c0_20, %c0_21] : memref<8x128xbf16, #tpu.memory_space<vmem>>, vector<8x128xbf16>
      tpu.vector_store %arg7[%c0_20, %c0_21], %24 {strides = array<i32>} : memref<8x128xbf16, #tpu.memory_space<vmem>>, vector<8x128xbf16>,
    } else {
    }
    return
  }
  func.func @transform_0(%arg0: i32, %arg1: i32) -> (i32, i32) {
    %c0_i32 = arith.constant 0 : i32
    %c0_i32_0 = arith.constant 0 : i32
    return %arg0, %c0_i32 : i32, i32
  }
  func.func @transform_1(%arg0: i32, %arg1: i32) -> (i32, i32) {
    %c0_i32 = arith.constant 0 : i32
    %c0_i32_0 = arith.constant 0 : i32
    return %c0_i32, %arg1 : i32, i32
  }
  func.func @transform_2(%arg0: i32, %arg1: i32) -> (i32, i32) {
    %c0_i32 = arith.constant 0 : i32
    %c0_i32_0 = arith.constant 0 : i32
    return %c0_i32, %arg1 : i32, i32
  }
  func.func @transform_3(%arg0: i32, %arg1: i32) -> (i32, i32) {
    %c0_i32 = arith.constant 0 : i32
    %c0_i32_0 = arith.constant 0 : i32
    return %arg1, %c0_i32 : i32, i32
  }
  func.func @transform_4(%arg0: i32, %arg1: i32) -> (i32, i32) {
    %c0_i32 = arith.constant 0 : i32
    %c0_i32_0 = arith.constant 0 : i32
    %c0_i32_1 = arith.constant 0 : i32
    return %c0_i32, %c0_i32_0 : i32, i32
  }
  func.func @transform_5(%arg0: i32, %arg1: i32) -> (i32, i32) {
    %c0_i32 = arith.constant 0 : i32
    %c0_i32_0 = arith.constant 0 : i32
    return %arg0, %c0_i32 : i32, i32
  }
}

</mosaic_0001>

<llo_original>
// kernel: _ffn_pallas.1
$region0: #{_ffn_pallas.1}
  #allocation0 [shape = 'u32[]', space=smem, size = 0x4, offset = 0x4, fixed_abs, tag = 'smem constant byte address 0x4 - core index']
  #allocation1 [shape = 'u32[72,128]{1,0:T(1,128)}', space=vmem, size = 0x9000, scoped, tag = 'internal scratch']
  #allocation2 [shape = 'f32[8,128]{1,0:T(8,128)}', space=vmem, size = 0x1000, scoped, tag = 'scratch operand']
  %s0 = inlined_call_operand.vmem [shape: bf16[16,128], index: 0, kind: input, shape index: {}]
  %s1 = inlined_call_operand.hbm [shape: bf16[128,128], index: 1, kind: input, shape index: {}]
  %s2 = inlined_call_operand.vmem [shape: f32[1,128], index: 2, kind: input, shape index: {}]
  %s3 = inlined_call_operand.hbm [shape: bf16[128,128], index: 3, kind: input, shape index: {}]
  %s4 = inlined_call_operand.vmem [shape: f32[1,128], index: 4, kind: input, shape index: {}]
  %s5 = inlined_call_operand.vmem [shape: bf16[16,128], index: 5, kind: output, shape index: {}]
  %s6 = sld [smem:[#allocation0]]
  $region69: #{_ffn_pallas.1} parent=0
    _
  %s8 = ssub.s32 1, %s6
  %s9 = scalar_select 0, %s8, %s6
  $region1: #{_ffn_pallas.1} parent=0
    #allocation3 [shape = 'u8[32768]{0}', space=vmem, size = 0x8000, scoped, tag = 'input window, operand 1, single buffered']
    #allocation4 [shape = 's32[2]{0}', space=sflag, size = 0x8, scoped, tag = 'scoped memory for _ffn_pallas.1']
    #allocation5 [shape = 'u8[32768]{0}', space=vmem, size = 0x8000, scoped, tag = 'input window, operand 3, single buffered']
    #allocation6 [shape = 's32[1]{0}', space=sflag, size = 0x4, scoped, tag = 'scoped memory for _ffn_pallas.1']
    %10 = vsyncpa [#allocation4], 0
    %11 = vsyncpa [#allocation6], 0
    loop: start=0, step=1, limit=4
    $region2: #{_ffn_pallas.1} parent=1 // loop_pre_header
      _
    $region3: #{_ffn_pallas.1} parent=1 // loop_header
      %s13 = sphi 0, %s17
      %p14 = scmp.ge.s32.totalorder %s13, 4
      %s20 = sphi 0, %s32
      %s21 = sphi 0, %s28
      %s22 = sphi 0, %s20
      %s23 = sphi 0, %s21
      %s24 = sphi 0, %s22
      %s25 = sphi 0, %s23
      %s35 = sphi 0, %s37
      %s38 = sphi 0, %s35
      %s39 = sphi 0, %s38
      %s55 = sphi 0, %s39
      %s61 = sphi 0, %s63
      %s64 = sphi 0, %s61
      %s65 = sphi 0, %s64
      %s81 = sphi 0, %s65
      %s87 = sphi 0, %s89
      %s90 = sphi 0, %s87
      %s91 = sphi 0, %s90
      %s107 = sphi 0, %s91
      %s113 = sphi 0, %s115
      %s116 = sphi 0, %s113
      %s117 = sphi 0, %s116
      %s133 = sphi 0, %s117
      %s137 = sphi 0, %s137
      %s139 = sphi 0, %s137
      %s140 = sphi 0, %s139
      %s154 = sphi 0, %s140
      %s160 = sphi 0, %s162
      %s163 = sphi 0, %s160
      %s164 = sphi 0, %s163
      %s180 = sphi 0, %s164
    $region4: #{_ffn_pallas.1} parent=1 // loop_header_branch
      %16 = sbr.rel (%p14) target = $region8
    $region5: #{_ffn_pallas.1} parent=1 // loop_body
      %s18 = ssub.s32 %s13, 1
      %s19 = ssub.s32 %s13, 2
      %s26 = sadd.s32 1, %s21
      %p27 = scmp.ge.s32.totalorder %s26, 1
      %s28 = scalar_select %p27, 0, %s26
      %s29 = sadd.s32 1, %s20
      %s30 = scalar_select %p27, %s29, %s20
      %p31 = scmp.ge.s32.totalorder %s30, 2
      %s32 = scalar_select %p31, 0, %s30
      %s33 = ssub.s32 %s20, %s32
      %p34 = scmp.eq.s32.totalorder %s33, 0
      %s36 = sadd.s32 %s35, 1
      %s37 = scalar_select %p34, %s35, %s36
      %p40 = pneg %p34
      %p41 = scmp.eq.s32.totalorder %s13, 1
      %p42 = por %p40, %p41
      %p43 = scmp.ne.s32.totalorder %s35, %s38
      %p44 = scmp.eq.s32.totalorder %s13, 0
      %p45 = por %p43, %p44
      %p46 = scmp.ne.s32.totalorder %s35, %s38
      %p47 = scmp.eq.s32.totalorder %s18, 1
      %p48 = por %p46, %p47
      %p49 = scmp.ne.s32.totalorder %s38, %s39
      %p50 = scmp.eq.s32.totalorder %s18, 0
      %p51 = por %p49, %p50
      %p52 = scmp.ne.s32.totalorder %s38, %s39
      %p53 = scmp.eq.s32.totalorder %s19, 1
      %p54 = por %p52, %p53
      %p56 = scmp.ne.s32.totalorder %s39, %s55
      %p57 = scmp.eq.s32.totalorder %s19, 0
      %p58 = por %p56, %p57
      %s59 = ssub.s32 %s21, %s28
      %p60 = scmp.eq.s32.totalorder %s59, 0
      %s62 = sadd.s32 %s61, 1
      %s63 = scalar_select %p60, %s61, %s62
      %p66 = pneg %p60
      %p67 = scmp.eq.s32.totalorder %s13, 1
      %p68 = por %p66, %p67
      %p69 = scmp.ne.s32.totalorder %s61, %s64
      %p70 = scmp.eq.s32.totalorder %s13, 0
      %p71 = por %p69, %p70
      %p72 = scmp.ne.s32.totalorder %s61, %s64
      %p73 = scmp.eq.s32.totalorder %s18, 1
      %p74 = por %p72, %p73
      %p75 = scmp.ne.s32.totalorder %s64, %s65
      %p76 = scmp.eq.s32.totalorder %s18, 0
      %p77 = por %p75, %p76
      %p78 = scmp.ne.s32.totalorder %s64, %s65
      %p79 = scmp.eq.s32.totalorder %s19, 1
      %p80 = por %p78, %p79
      %p82 = scmp.ne.s32.totalorder %s65, %s81
      %p83 = scmp.eq.s32.totalorder %s19, 0
      %p84 = por %p82, %p83
      %s85 = ssub.s32 %s21, %s28
      %p86 = scmp.eq.s32.totalorder %s85, 0
      %s88 = sadd.s32 %s87, 1
      %s89 = scalar_select %p86, %s87, %s88
      %p92 = pneg %p86
      %p93 = scmp.eq.s32.totalorder %s13, 1
      %p94 = por %p92, %p93
      %p95 = scmp.ne.s32.totalorder %s87, %s90
      %p96 = scmp.eq.s32.totalorder %s13, 0
      %p97 = por %p95, %p96
      %p98 = scmp.ne.s32.totalorder %s87, %s90
      %p99 = scmp.eq.s32.totalorder %s18, 1
      %p100 = por %p98, %p99
      %p101 = scmp.ne.s32.totalorder %s90, %s91
      %p102 = scmp.eq.s32.totalorder %s18, 0
      %p103 = por %p101, %p102
      %p104 = scmp.ne.s32.totalorder %s90, %s91
      %p105 = scmp.eq.s32.totalorder %s19, 1
      %p106 = por %p104, %p105
      %p108 = scmp.ne.s32.totalorder %s91, %s107
      %p109 = scmp.eq.s32.totalorder %s19, 0
      %p110 = por %p108, %p109
      %s111 = ssub.s32 %s21, %s28
      %p112 = scmp.eq.s32.totalorder %s111, 0
      %s114 = sadd.s32 %s113, 1
      %s115 = scalar_select %p112, %s113, %s114
      %p118 = pneg %p112
      %p119 = scmp.eq.s32.totalorder %s13, 1
      %p120 = por %p118, %p119
      %p121 = scmp.ne.s32.totalorder %s113, %s116
      %p122 = scmp.eq.s32.totalorder %s13, 0
      %p123 = por %p121, %p122
      %p124 = scmp.ne.s32.totalorder %s113, %s116
      %p125 = scmp.eq.s32.totalorder %s18, 1
      %p126 = por %p124, %p125
      %p127 = scmp.ne.s32.totalorder %s116, %s117
      %p128 = scmp.eq.s32.totalorder %s18, 0
      %p129 = por %p127, %p128
      %p130 = scmp.ne.s32.totalorder %s116, %s117
      %p131 = scmp.eq.s32.totalorder %s19, 1
      %p132 = por %p130, %p131
      %p134 = scmp.ne.s32.totalorder %s117, %s133
      %p135 = scmp.eq.s32.totalorder %s19, 0
      %p136 = por %p134, %p135
      %s138 = sadd.s32 %s137, 1
      %p141 = scmp.eq.s32.totalorder %s13, 1
      %p142 = scmp.ne.s32.totalorder %s137, %s139
      %p143 = scmp.eq.s32.totalorder %s13, 0
      %p144 = por %p142, %p143
      %p145 = scmp.ne.s32.totalorder %s137, %s139
      %p146 = scmp.eq.s32.totalorder %s18, 1
      %p147 = por %p145, %p146
      %p148 = scmp.ne.s32.totalorder %s139, %s140
      %p149 = scmp.eq.s32.totalorder %s18, 0
      %p150 = por %p148, %p149
      %p151 = scmp.ne.s32.totalorder %s139, %s140
      %p152 = scmp.eq.s32.totalorder %s19, 1
      %p153 = por %p151, %p152
      %p155 = scmp.ne.s32.totalorder %s140, %s154
      %p156 = scmp.eq.s32.totalorder %s19, 0
      %p157 = por %p155, %p156
      %s158 = ssub.s32 %s20, %s32
      %p159 = scmp.eq.s32.totalorder %s158, 0
      %s161 = sadd.s32 %s160, 1
      %s162 = scalar_select %p159, %s160, %s161
      %p165 = pneg %p159
      %p166 = scmp.eq.s32.totalorder %s13, 1
      %p167 = por %p165, %p166
      %p168 = scmp.ne.s32.totalorder %s160, %s163
      %p169 = scmp.eq.s32.totalorder %s13, 0
      %p170 = por %p168, %p169
      %p171 = scmp.ne.s32.totalorder %s160, %s163
      %p172 = scmp.eq.s32.totalorder %s18, 1
      %p173 = por %p171, %p172
      %p174 = scmp.ne.s32.totalorder %s163, %s164
      %p175 = scmp.eq.s32.totalorder %s18, 0
      %p176 = por %p174, %p175
      %p177 = scmp.ne.s32.totalorder %s163, %s164
      %p178 = scmp.eq.s32.totalorder %s19, 1
      %p179 = por %p177, %p178
      %p181 = scmp.ne.s32.totalorder %s164, %s180
      %p182 = scmp.eq.s32.totalorder %s19, 0
      %p183 = por %p181, %p182
      %p184 = scmp.le.s32.totalorder 1, %s13
      %p185 = scmp.lt.s32.totalorder %s13, 3
      %p186 = pnand %p184, %p185
      %p187 = pneg %p186
      // Predicated region
      $region9: #{_ffn_pallas.1} parent=5 // pred_check
        _
      $region10: #{_ffn_pallas.1} parent=5 // pred_check_branch
        %189 = sbr.rel (%p186) target = $region12
      $region11: #{_ffn_pallas.1} parent=5 // pred_region
        %s190 = ssub.s32 %s13, 1
        // Predicated region
        $region13: #{_ffn_pallas.1} parent=11 // pred_check
          %p191 = pneg %p77
        $region14: #{_ffn_pallas.1} parent=11 // pred_check_branch
          %193 = sbr.rel (%p191) target = $region16
        $region15: #{_ffn_pallas.1} parent=11 // pred_region
          %195 = vsyncadd [#allocation4], 0
          %s196 = smul.addr %s23, 4
          %s197 = scalar_lea.hbm %s1, %s196
          %s198 = sshll.u32 %s197, 4
          %s199 = int_to_ptr.hbm [resolvable:$true] %s198
          %s200 = sshll.u32 [#allocation3], 4
          %s201 = int_to_ptr.vmem [resolvable:$true] %s200
          %206 = dma.hbm_to_vmem [thread:$0]  %s199, 1024, %s201, [#allocation4], 64, 64, 4
        $region16: #{_ffn_pallas.1} parent=11 // pred_fallthru
          _
        // Predicated region
        $region17: #{_ffn_pallas.1} parent=11 // pred_check
          %p207 = pneg %p103
        $region18: #{_ffn_pallas.1} parent=11 // pred_check_branch
          %209 = sbr.rel (%p207) target = $region20
        $region19: #{_ffn_pallas.1} parent=11 // pred_region
          %p210 = scmp.lt.s32.totalorder %s23, 0
          %s211 = scalar_select %p210, %s23, 0
          %s212 = scalar_lea.vmem %s2, %s211
        $region20: #{_ffn_pallas.1} parent=11 // pred_fallthru
          _
        // Predicated region
        $region21: #{_ffn_pallas.1} parent=11 // pred_check
          %p213 = pneg %p129
        $region22: #{_ffn_pallas.1} parent=11 // pred_check_branch
          %215 = sbr.rel (%p213) target = $region24
        $region23: #{_ffn_pallas.1} parent=11 // pred_region
          %s216 = smul.u32 16, %s23
          %218 = vsyncadd [#allocation6], 0
          %s219 = smul.addr %s216, 4
          %s220 = scalar_lea.hbm %s3, %s219
          %s221 = sshll.u32 %s220, 4
          %s222 = int_to_ptr.hbm [resolvable:$true] %s221
          %s223 = sshll.u32 [#allocation5], 4
          %s224 = int_to_ptr.vmem [resolvable:$true] %s223
          %229 = dma.hbm_to_vmem [thread:$0]  %s222, 1024, %s224, [#allocation6], 64, 64, 4
        $region24: #{_ffn_pallas.1} parent=11 // pred_fallthru
          _
        // Predicated region
        $region25: #{_ffn_pallas.1} parent=11 // pred_check
          %p230 = pneg %p150
        $region26: #{_ffn_pallas.1} parent=11 // pred_check_branch
          %232 = sbr.rel (%p230) target = $region28
        $region27: #{_ffn_pallas.1} parent=11 // pred_region
          _
        $region28: #{_ffn_pallas.1} parent=11 // pred_fallthru
          _
      $region12: #{_ffn_pallas.1} parent=5 // pred_fallthru
        _
      %p233 = scmp.lt.s32.totalorder %s13, 2
      // Predicated region
      $region29: #{_ffn_pallas.1} parent=5 // pred_check
        %p234 = pneg %p233
      $region30: #{_ffn_pallas.1} parent=5 // pred_check_branch
        %236 = sbr.rel (%p234) target = $region32
      $region31: #{_ffn_pallas.1} parent=5 // pred_region
        // Predicated region
        $region33: #{_ffn_pallas.1} parent=31 // pred_check
          %p237 = pneg %p45
        $region34: #{_ffn_pallas.1} parent=31 // pred_check_branch
          %239 = sbr.rel (%p237) target = $region36
        $region35: #{_ffn_pallas.1} parent=31 // pred_region
          %p240 = scmp.lt.s32.totalorder %s20, 1
          %s241 = scalar_select %p240, %s20, 1
          %s242 = smul.addr %s241, 4
          %s243 = scalar_lea.vmem %s0, %s242
        $region36: #{_ffn_pallas.1} parent=31 // pred_fallthru
          _
      $region32: #{_ffn_pallas.1} parent=5 // pred_fallthru
        _
      %p244 = scmp.le.s32.totalorder 1, %s13
      %p245 = scmp.lt.s32.totalorder %s13, 3
      %p246 = pnand %p244, %p245
      %p247 = pneg %p246
      // Predicated region
      $region37: #{_ffn_pallas.1} parent=5 // pred_check
        _
      $region38: #{_ffn_pallas.1} parent=5 // pred_check_branch
        %249 = sbr.rel (%p246) target = $region40
      $region39: #{_ffn_pallas.1} parent=5 // pred_region
        %s250 = ssub.s32 %s13, 1
        // Predicated region
        $region41: #{_ffn_pallas.1} parent=39 // pred_check
          %p251 = pneg %p77
        $region42: #{_ffn_pallas.1} parent=39 // pred_check_branch
          %253 = sbr.rel (%p251) target = $region44
        $region43: #{_ffn_pallas.1} parent=39 // pred_region
          %255 = dma.done [#allocation4], 1024
        $region44: #{_ffn_pallas.1} parent=39 // pred_fallthru
          _
        // Predicated region
        $region45: #{_ffn_pallas.1} parent=39 // pred_check
          %p256 = pneg %p129
        $region46: #{_ffn_pallas.1} parent=39 // pred_check_branch
          %258 = sbr.rel (%p256) target = $region48
        $region47: #{_ffn_pallas.1} parent=39 // pred_region
          %260 = dma.done [#allocation6], 1024
        $region48: #{_ffn_pallas.1} parent=39 // pred_fallthru
          _
        %p261 = scmp.lt.s32.totalorder %s22, 1
        %s262 = scalar_select %p261, %s22, 1
        %s263 = smul.addr %s262, 4
        %s264 = scalar_lea.vmem %s0, %s263
        %p265 = pneg %p51
        %p266 = pneg %p48
        %p267 = pneg %p77
        %p268 = pneg %p74
        %p269 = scmp.lt.s32.totalorder %s23, 0
        %s270 = scalar_select %p269, %s23, 0
        %s271 = scalar_lea.vmem %s2, %s270
        %p272 = pneg %p103
        %p273 = pneg %p100
        %p274 = pneg %p129
        %p275 = pneg %p126
        %p276 = pneg %p150
        %p277 = pneg %p147
        %p278 = pneg %p176
        %p279 = pneg %p173
        %p280 = scmp.lt.s32.totalorder %s22, 1
        %s281 = scalar_select %p280, %s22, 1
        %s282 = smul.addr %s281, 4
        %s283 = scalar_lea.vmem %s5, %s282
        %p284 = scmp.lt.s32.totalorder %s22, 1
        %s285 = scalar_select %p284, %s22, 1
        %s286 = smul.addr %s285, 4
        %s287 = scalar_lea.vmem %s0, %s286
        %p288 = scmp.lt.s32.totalorder %s23, 0
        %s289 = scalar_select %p288, %s23, 0
        %s290 = scalar_lea.vmem %s2, %s289
        %s291 = smul.u32 16, %s23
        %p292 = scmp.lt.s32.totalorder %s22, 1
        %s293 = scalar_select %p292, %s22, 1
        %s294 = smul.addr %s293, 4
        %s295 = scalar_lea.vmem %s5, %s294
        %p296 = scmp.eq.s32.totalorder %s23, 0
        // Predicated region
        $region49: #{_ffn_pallas.1} parent=39 // pred_check
          %p297 = pneg %p296
        $region50: #{_ffn_pallas.1} parent=39 // pred_check_branch
          %299 = sbr.rel (%p297) target = $region52
        $region51: #{_ffn_pallas.1} parent=39 // pred_region
          %300 = vst [vmem:[#allocation2] sm:$0xff] 0.0
        $region52: #{_ffn_pallas.1} parent=39 // pred_fallthru
          _
        %v301 = vld [vmem:[%s287] sm:$0xf]
        %v302 = vld [vmem:[#allocation3] sm:$0xf]
        %v303 = vld [vmem:[#allocation3 + $0x4] sm:$0xf]
        %v304 = vld [vmem:[#allocation3 + $0x8] sm:$0xf]
        %v305 = vld [vmem:[#allocation3 + $0xc] sm:$0xf]
        %v306 = vld [vmem:[#allocation3 + $0x10] sm:$0xf]
        %v307 = vld [vmem:[#allocation3 + $0x14] sm:$0xf]
        %v308 = vld [vmem:[#allocation3 + $0x18] sm:$0xf]
        %v309 = vld [vmem:[#allocation3 + $0x1c] sm:$0xf]
        %v310 = vld [vmem:[#allocation3 + $0x20] sm:$0xf]
        %v311 = vld [vmem:[#allocation3 + $0x24] sm:$0xf]
        %v312 = vld [vmem:[#allocation3 + $0x28] sm:$0xf]
        %v313 = vld [vmem:[#allocation3 + $0x2c] sm:$0xf]
        %v314 = vld [vmem:[#allocation3 + $0x30] sm:$0xf]
        %v315 = vld [vmem:[#allocation3 + $0x34] sm:$0xf]
        %v316 = vld [vmem:[#allocation3 + $0x38] sm:$0xf]
        %v317 = vld [vmem:[#allocation3 + $0x3c] sm:$0xf]
        %v318 = vld [vmem:[%s290] sm:$0x1]
        %v320 = vperm.slane %v318, 0
        %v338 = vunpack.c.l.b16 %v302
        %v339 = vunpack.c.l.b16 %v303
        %v340 = vunpack.c.l.b16 %v304
        %v341 = vunpack.c.l.b16 %v305
        %v342 = vunpack.c.l.b16 %v306
        %v343 = vunpack.c.l.b16 %v307
        %v344 = vunpack.c.l.b16 %v308
        %v345 = vunpack.c.l.b16 %v309
        %v346 = vunpack.c.l.b16 %v310
        %v347 = vunpack.c.l.b16 %v311
        %v348 = vunpack.c.l.b16 %v312
        %v349 = vunpack.c.l.b16 %v313
        %v350 = vunpack.c.l.b16 %v314
        %v351 = vunpack.c.l.b16 %v315
        %v352 = vunpack.c.l.b16 %v316
        %v353 = vunpack.c.l.b16 %v317
        %v354 = vpack.c.b16 %v339, %v338
        %v355 = vpack.c.b16 %v341, %v340
        %v356 = vpack.c.b16 %v343, %v342
        %v357 = vpack.c.b16 %v345, %v344
        %v358 = vpack.c.b16 %v347, %v346
        %v359 = vpack.c.b16 %v349, %v348
        %v360 = vpack.c.b16 %v351, %v350
        %v361 = vpack.c.b16 %v353, %v352
        %370 = vmatpush.bf16.msra.mxu0 %v361
        %371 = vmatpush.bf16.msra.mxu0 %v360
        %372 = vmatpush.bf16.msra.mxu0 %v359
        %373 = vmatpush.bf16.msra.mxu0 %v358
        %374 = vmatpush.bf16.msra.mxu0 %v357
        %375 = vmatpush.bf16.msra.mxu0 %v356
        %376 = vmatpush.bf16.msra.mxu0 %v355
        %377 = vmatpush.bf16.msra.mxu0 %v354
        %378 = vmatmul.bf16.gmra.mxu0 %v301
        %v379 = vpop.f32.mrf.mxu0
        %v380 = vadd.f32 %v320, %v379
        %v381 = vpop.f32.mrf.mxu0
        %382 = vdwg.mxu0
        %v383 = vmax.f32 %v380, 0.0
        %v384 = vld [vmem:[#allocation2] sm:$0xff]
        %v385 = vpack.c.bf16 %v383, %v383
        %v386 = vld [vmem:[#allocation5] sm:$0xf]
        %v387 = vld [vmem:[#allocation5 + $0x4] sm:$0xf]
        %v388 = vld [vmem:[#allocation5 + $0x8] sm:$0xf]
        %v389 = vld [vmem:[#allocation5 + $0xc] sm:$0xf]
        %v390 = vld [vmem:[#allocation5 + $0x10] sm:$0xf]
        %v391 = vld [vmem:[#allocation5 + $0x14] sm:$0xf]
        %v392 = vld [vmem:[#allocation5 + $0x18] sm:$0xf]
        %v393 = vld [vmem:[#allocation5 + $0x1c] sm:$0xf]
        %v394 = vld [vmem:[#allocation5 + $0x20] sm:$0xf]
        %v395 = vld [vmem:[#allocation5 + $0x24] sm:$0xf]
        %v396 = vld [vmem:[#allocation5 + $0x28] sm:$0xf]
        %v397 = vld [vmem:[#allocation5 + $0x2c] sm:$0xf]
        %v398 = vld [vmem:[#allocation5 + $0x30] sm:$0xf]
        %v399 = vld [vmem:[#allocation5 + $0x34] sm:$0xf]
        %v400 = vld [vmem:[#allocation5 + $0x38] sm:$0xf]
        %v401 = vld [vmem:[#allocation5 + $0x3c] sm:$0xf]
        %v418 = vunpack.c.l.b16 %v386
        %v419 = vunpack.c.l.b16 %v387
        %v420 = vunpack.c.l.b16 %v388
        %v421 = vunpack.c.l.b16 %v389
        %v422 = vunpack.c.l.b16 %v390
        %v423 = vunpack.c.l.b16 %v391
        %v424 = vunpack.c.l.b16 %v392
        %v425 = vunpack.c.l.b16 %v393
        %v426 = vunpack.c.l.b16 %v394
        %v427 = vunpack.c.l.b16 %v395
        %v428 = vunpack.c.l.b16 %v396
        %v429 = vunpack.c.l.b16 %v397
        %v430 = vunpack.c.l.b16 %v398
        %v431 = vunpack.c.l.b16 %v399
        %v432 = vunpack.c.l.b16 %v400
        %v433 = vunpack.c.l.b16 %v401
        %v434 = vpack.c.b16 %v419, %v418
        %v435 = vpack.c.b16 %v421, %v420
        %v436 = vpack.c.b16 %v423, %v422
        %v437 = vpack.c.b16 %v425, %v424
        %v438 = vpack.c.b16 %v427, %v426
        %v439 = vpack.c.b16 %v429, %v428
        %v440 = vpack.c.b16 %v431, %v430
        %v441 = vpack.c.b16 %v433, %v432
        %450 = vmatpush.bf16.msra.mxu0 %v441
        %451 = vmatpush.bf16.msra.mxu0 %v440
        %452 = vmatpush.bf16.msra.mxu0 %v439
        %453 = vmatpush.bf16.msra.mxu0 %v438
        %454 = vmatpush.bf16.msra.mxu0 %v437
        %455 = vmatpush.bf16.msra.mxu0 %v436
        %456 = vmatpush.bf16.msra.mxu0 %v435
        %457 = vmatpush.bf16.msra.mxu0 %v434
        %458 = vmatmul.bf16.gmra.mxu0 %v385
        %v459 = vpop.f32.mrf.mxu0
        %v460 = vadd.f32 0.0, %v459
        %v461 = vpop.f32.mrf.mxu0
        %462 = vdwg.mxu0
        %v463 = vadd.f32 %v384, %v460
        %464 = vst [vmem:[#allocation2] sm:$0xff] %v463
        // Predicated region
        $region53: #{_ffn_pallas.1} parent=39 // pred_check
          %p465 = pneg %p296
        $region54: #{_ffn_pallas.1} parent=39 // pred_check_branch
          %467 = sbr.rel (%p465) target = $region56
        $region55: #{_ffn_pallas.1} parent=39 // pred_region
          %v468 = vld [vmem:[#allocation2] sm:$0xff]
          %v469 = vld [vmem:[%s4] sm:$0x1]
          %v471 = vperm.slane %v469, 0
          %v473 = vadd.f32 %v468, %v471
          %v474 = vpack.c.bf16 %v473, %v473
          %475 = vst [vmem:[%s295] sm:$0xf] %v474
        $region56: #{_ffn_pallas.1} parent=39 // pred_fallthru
          _
        %p476 = scmp.lt.s32.totalorder %s22, 1
        %s477 = scalar_select %p476, %s22, 1
        %s478 = smul.addr %s477, 4
        %s479 = scalar_lea.vmem %s5, %s478
        // Predicated region
        $region57: #{_ffn_pallas.1} parent=39 // pred_check
          %p480 = pneg %p173
        $region58: #{_ffn_pallas.1} parent=39 // pred_check_branch
          %482 = sbr.rel (%p480) target = $region60
        $region59: #{_ffn_pallas.1} parent=39 // pred_region
          _
        $region60: #{_ffn_pallas.1} parent=39 // pred_fallthru
          _
      $region40: #{_ffn_pallas.1} parent=5 // pred_fallthru
        _
      %p483 = scmp.le.s32.totalorder 2, %s13
      // Predicated region
      $region61: #{_ffn_pallas.1} parent=5 // pred_check
        %p484 = pneg %p483
      $region62: #{_ffn_pallas.1} parent=5 // pred_check_branch
        %486 = sbr.rel (%p484) target = $region64
      $region63: #{_ffn_pallas.1} parent=5 // pred_region
        %s487 = ssub.s32 %s13, 2
        // Predicated region
        $region65: #{_ffn_pallas.1} parent=63 // pred_check
          %p488 = pneg %p179
        $region66: #{_ffn_pallas.1} parent=63 // pred_check_branch
          %490 = sbr.rel (%p488) target = $region68
        $region67: #{_ffn_pallas.1} parent=63 // pred_region
          %p491 = scmp.lt.s32.totalorder %s24, 1
          %s492 = scalar_select %p491, %s24, 1
          %s493 = smul.addr %s492, 4
          %s494 = scalar_lea.vmem %s5, %s493
        $region68: #{_ffn_pallas.1} parent=63 // pred_fallthru
          _
      $region64: #{_ffn_pallas.1} parent=5 // pred_fallthru
        _
    $region6: #{_ffn_pallas.1} parent=1 // loop_footer
      %s17 = sadd.s32 1, %s13
    $region7: #{_ffn_pallas.1} parent=1 // loop_footer_branch
      %12 = sbr.rel target = $region3
    $region8: #{_ffn_pallas.1} parent=1 // loop_exit
      _
    %495 = vsyncpa [#allocation4], 1
    %s496 = scalar_lea.sflag [#allocation4], 1
    %497 = vsyncpa %s496, 1
    %498 = vsyncpa [#allocation6], 1

</llo_original>
